<compile_context>
chip_gen: v7x
topology: tpu7x:2x2x1
jax: 0.10.0
libtpu: 0.0.40
codegen_flags: <defaults>
</compile_context>

<pallas_src>
import jax
import jax.numpy as jnp
from jax.experimental import pallas as pl
from jax.experimental.pallas import tpu as pltpu

_LANE = 128
_EPS = 1e-8


def _pixelnorm_kernel(x_ref, o_ref):
    # Blocks are (NB, C, TILE_HW); the channel reduction is fully inside the
    # block.  Pass 1: f32 sum of squares over C.  Pass 2: re-read x_ref so the
    # f32 copy need not stay live across the rsqrt, and do the final multiply
    # in the I/O dtype for sub-32-bit inputs (halves VALU/vreg pressure).
    x32 = x_ref[...].astype(jnp.float32)
    c = x32.shape[1]
    sum_sq = jnp.sum(x32 * x32, axis=1, keepdims=True)
    inv = jax.lax.rsqrt(sum_sq * (1.0 / c) + _EPS)  # EUP slot
    if o_ref.dtype == jnp.float32:
        o_ref[...] = x_ref[...] * inv
    else:
        o_ref[...] = x_ref[...] * inv.astype(o_ref.dtype)


def _vmem_capacity_bytes():
    try:
        return int(pltpu.get_tpu_info().vmem_capacity_bytes)
    except Exception:
        return 64 << 20  # conservative default (v7x per-TensorCore VMEM)


def _choose_tile_hw(c, hw, itemsize, target_bytes):
    """Largest lane-dense (multiple-of-128) HW tile that fits target_bytes."""
    budget = max(_LANE, (target_bytes // max(1, c * itemsize)) // _LANE * _LANE)
    if budget >= hw:
        return hw  # whole row in one tile (full-dim block is always legal)
    if hw % _LANE == 0:
        # Prefer an exact divisor so every tile is full (no masked tail).
        t = budget
        while t >= _LANE:
            if hw % t == 0:
                return t
            t -= _LANE
    return budget  # cdiv grid; last tile masked on writeback


def _fold_batch(n, c, cols, itemsize, target_bytes):
    """Fold batch elements into one block to amortize per-step overhead, but
    keep >= 2 grid blocks when the layer is non-trivial so both v7x
    TensorCores get work (neutral on single-core v5e/v6e)."""
    per_batch = c * cols * itemsize
    nontrivial = n * per_batch > (1 << 20)
    for d in range(n, 0, -1):
        if n % d:
            continue
        if nontrivial and d == n and n >= 2:
            continue  # leave >= 2 blocks on the parallel batch axis
        if d * per_batch <= target_bytes:
            return d
    return 1


def pixel_norm(x):
    """x: (N, C, H, W) -> (N, C, H, W), PixelNorm over the channel dim."""
    n, c, h, w = x.shape
    hw = h * w

    if hw < _LANE:
        # Tiny early-resolution layers: sub-128-lane masked stores and fixed
        # pallas_call overhead dominate; let XLA fuse the plain expression.
        x32 = x.astype(jnp.float32)
        inv = jax.lax.rsqrt(jnp.mean(x32 * x32, axis=1, keepdims=True) + _EPS)
        return (x32 * inv).astype(x.dtype)

    itemsize = jnp.dtype(x.dtype).itemsize
    vmem_cap = _vmem_capacity_bytes()
    # Generation-aware block target: smaller on 64 MiB-VMEM parts (v7x).
    target = (6 << 20) if vmem_cap <= (64 << 20) else (8 << 20)

    x2 = x.reshape(n, c, hw)
    tile_hw = _choose_tile_hw(c, hw, itemsize, target)
    nb = 1
    if tile_hw >= hw:
        nb = _fold_batch(n, c, hw, itemsize, target)
    grid = (n // nb, pl.cdiv(hw, tile_hw))

    block_bytes = nb * c * tile_hw * itemsize
    # in + out double-buffered, ~1 f32 block of in-kernel temporaries, headroom.
    vmem_needed = 4 * block_bytes + nb * c * tile_hw * 4 + (4 << 20)
    vmem_budget = max(32 << 20, (vmem_cap * 3) // 4)  # ~48 MiB on v7x
    vmem_limit = int(min(vmem_budget, max(32 << 20, vmem_needed)))

    cost = pl.CostEstimate(
        flops=3 * n * c * hw,
        transcendentals=n * hw,
        bytes_accessed=2 * n * c * hw * itemsize,
    )

    out = pl.pallas_call(
        _pixelnorm_kernel,
        out_shape=jax.ShapeDtypeStruct((n, c, hw), x.dtype),
        grid_spec=pltpu.PrefetchScalarGridSpec(
            num_scalar_prefetch=0,
            grid=grid,
            in_specs=[pl.BlockSpec((nb, c, tile_hw), lambda i, j: (i, 0, j))],
            out_specs=pl.BlockSpec((nb, c, tile_hw), lambda i, j: (i, 0, j)),
        ),
        compiler_params=pltpu.CompilerParams(
            # Every block is independent -> both axes parallel (feeds both
            # TensorCores on v7x; neutral on v5e/v6e).
            dimension_semantics=("parallel", "parallel"),
            vmem_limit_bytes=vmem_limit,
        ),
        cost_estimate=cost,
    )(x2)

    return out.reshape(n, c, h, w)


if __name__ == "__main__":
    key = jax.random.PRNGKey(0)

    # Main test: small NCHW shape consistent with the module.
    x = jax.random.normal(key, (2, 4, 16, 16), dtype=jnp.float32)
    y = pixel_norm(x)
    jax.block_until_ready(y)
    ref = x * jax.lax.rsqrt(jnp.mean(x * x, axis=1, keepdims=True) + 1e-8)
    assert y.shape == x.shape and y.dtype == x.dtype
    assert jnp.allclose(y, ref, atol=1e-5, rtol=1e-5)

    # bf16 path with a larger spatial extent (lane-dense tiles).
    xb = jax.random.normal(key, (1, 64, 64, 64), dtype=jnp.bfloat16)
    yb = pixel_norm(xb)
    jax.block_until_ready(yb)
    xb32 = xb.astype(jnp.float32)
    refb = (xb32 * jax.lax.rsqrt(jnp.mean(xb32 * xb32, axis=1, keepdims=True)
                                 + 1e-8)).astype(jnp.bfloat16)
    assert yb.dtype == xb.dtype
    assert jnp.allclose(yb.astype(jnp.float32), refb.astype(jnp.float32),
                        atol=2e-2, rtol=2e-2)

    # Tiny 4x4 layer exercises the hw<128 fused-jnp fallback.
    xs = jax.random.normal(key, (2, 8, 4, 4), dtype=jnp.float32)
    ys = pixel_norm(xs)
    jax.block_until_ready(ys)
    refs = xs * jax.lax.rsqrt(jnp.mean(xs * xs, axis=1, keepdims=True) + 1e-8)
    assert jnp.allclose(ys, refs, atol=1e-5, rtol=1e-5)

    print("KERNEL_OK")
</pallas_src>

<mosaic_0001>
module attributes {stable_mosaic.version = 11 : i64} {
  func.func @_pixelnorm_kernel(%arg0: i32, %arg1: i32, %arg2: memref<2x4x256xf32, #tpu.memory_space<vmem>>, %arg3: memref<2x4x256xf32, #tpu.memory_space<vmem>>) attributes {dimension_semantics = [#tpu.dimension_semantics<parallel>, #tpu.dimension_semantics<parallel>], iteration_bounds = array<i64: 1, 1>, scalar_prefetch = 0 : i64, scratch_operands = 0 : i64, tpu.core_type = #tpu.core_type<tc>, window_params = [{transform_indices = @transform_0, window_bounds = array<i64: 2, 4, 256>}, {transform_indices = @transform_1, window_bounds = array<i64: 2, 4, 256>}]} {
    %c0 = arith.constant 0 : index
    %c0_0 = arith.constant 0 : index
    %c0_1 = arith.constant 0 : index
    %0 = vector.load %arg2[%c0, %c0_0, %c0_1] : memref<2x4x256xf32, #tpu.memory_space<vmem>>, vector<2x4x256xf32>
    %1 = arith.mulf %0, %0 : vector<2x4x256xf32>
    %cst = arith.constant dense<0.000000e+00> : vector<2x256xf32>
    %2 = vector.multi_reduction <add>, %1, %cst [1] : vector<2x4x256xf32> to vector<2x256xf32>
    %3 = vector.shape_cast %2 : vector<2x256xf32> to vector<2x1x256xf32>
    %cst_2 = arith.constant 2.500000e-01 : f32
    %4 = vector.broadcast %cst_2 : f32 to vector<2x1x256xf32>
    %5 = arith.mulf %3, %4 : vector<2x1x256xf32>
    %cst_3 = arith.constant 9.99999993E-9 : f32
    %6 = vector.broadcast %cst_3 : f32 to vector<2x1x256xf32>
    %7 = arith.addf %5, %6 : vector<2x1x256xf32>
    %8 = math.rsqrt %7 : vector<2x1x256xf32>
    %c0_4 = arith.constant 0 : index
    %c0_5 = arith.constant 0 : index
    %c0_6 = arith.constant 0 : index
    %9 = vector.load %arg2[%c0_4, %c0_5, %c0_6] : memref<2x4x256xf32, #tpu.memory_space<vmem>>, vector<2x4x256xf32>
    %10 = vector.broadcast %8 : vector<2x1x256xf32> to vector<2x4x256xf32>
    %11 = arith.mulf %9, %10 : vector<2x4x256xf32>
    %c0_7 = arith.constant 0 : index
    %c0_8 = arith.constant 0 : index
    %c0_9 = arith.constant 0 : index
    %12 = vector.load %arg3[%c0_7, %c0_8, %c0_9] : memref<2x4x256xf32, #tpu.memory_space<vmem>>, vector<2x4x256xf32>
    tpu.vector_store %arg3[%c0_7, %c0_8, %c0_9], %11 {strides = array<i32>} : memref<2x4x256xf32, #tpu.memory_space<vmem>>, vector<2x4x256xf32>,
    return
  }
  func.func @transform_0(%arg0: i32, %arg1: i32) -> (i32, i32, i32) {
    %c0_i32 = arith.constant 0 : i32
    %c0_i32_0 = arith.constant 0 : i32
    return %arg0, %c0_i32, %arg1 : i32, i32, i32
  }
  func.func @transform_1(%arg0: i32, %arg1: i32) -> (i32, i32, i32) {
    %c0_i32 = arith.constant 0 : i32
    %c0_i32_0 = arith.constant 0 : i32
    return %arg0, %c0_i32, %arg1 : i32, i32, i32
  }
}

</mosaic_0001>

<llo_original>
// kernel: tpu_custom_call.1
$region0: #{tpu_custom_call.1}
  #allocation0 [shape = 'u32[]', space=smem, size = 0x4, offset = 0x4, fixed_abs, tag = 'smem constant byte address 0x4 - core index']
  #allocation1 [shape = 'u32[144,128]{1,0:T(1,128)}', space=vmem, size = 0x12000, scoped, tag = 'internal scratch']
  %s0 = inlined_call_operand.hbm [shape: f32[2,4,256], index: 0, kind: input, shape index: {}]
  %s1 = inlined_call_operand.hbm [shape: f32[2,4,256], index: 1, kind: output, shape index: {}]
  %s2 = sld [smem:[#allocation0]]
  $region18: #{tpu_custom_call.1} parent=0
    _
  %s4 = ssub.s32 1, %s2
  %s5 = scalar_select 0, %s4, %s2
  $region1: #{tpu_custom_call.1} parent=0
    #allocation2 [shape = 'u8[8192]{0}', space=vmem, size = 0x2000, scoped, tag = 'input window, operand 0, single buffered']
    #allocation3 [shape = 's32[1]{0}', space=sflag, size = 0x4, scoped, tag = 'scoped memory for tpu_custom_call.1']
    #allocation4 [shape = 's32[1]{0}', space=sflag, size = 0x4, scoped, tag = 'scoped memory for tpu_custom_call.1']
    #allocation5 [shape = 'u8[8192]{0}', space=vmem, size = 0x2000, scoped, tag = 'output window, operand 0, single buffered']
    %6 = vsyncpa [#allocation3], 0
    %7 = vsyncpa [#allocation4], 0
    // Predicated region
    $region2: #{tpu_custom_call.1} parent=1 // pred_check
      _
    $region3: #{tpu_custom_call.1} parent=1 // pred_check_branch
      %9 = sbr.rel (0) target = $region5
    $region4: #{tpu_custom_call.1} parent=1 // pred_region
      %s11 = ssub.s32 256, 256
      %12 = vsyncadd [#allocation3], %s11
      %s13 = sshll.u32 [#allocation2], 4
      %s14 = int_to_ptr.vmem [resolvable:$true] %s13
      %19 = dma.hbm_to_vmem [thread:$0]  %s0, 256, %s14, [#allocation3], 128, 128, 8
    $region5: #{tpu_custom_call.1} parent=1 // pred_fallthru
      _
    // Predicated region
    $region6: #{tpu_custom_call.1} parent=1 // pred_check
      _
    $region7: #{tpu_custom_call.1} parent=1 // pred_check_branch
      %21 = sbr.rel (0) target = $region9
    $region8: #{tpu_custom_call.1} parent=1 // pred_region
      %22 = dma.done [#allocation3], 256
    $region9: #{tpu_custom_call.1} parent=1 // pred_fallthru
      _
    %v23 = vld [vmem:[#allocation2] sm:$0xff]
    %v24 = vld [vmem:[#allocation2 + $0x8] sm:$0xff]
    %v25 = vmul.f32 %v23, %v23
    %v26 = vmul.f32 %v24, %v24
    %v29 = vcombine.high %v25, %v25
    %v30 = vcombine.high %v26, %v26
    %vm33 = vcmask 1043456
    %v34 = vsel %vm33, %v25, 0.0
    %v35 = vrot.slane %v34, 4
    %v36 = vadd.f32 %v34, %v35
    %v37 = vrot.slane %v36, 2
    %v38 = vadd.f32 %v36, %v37
    %v39 = vrot.slane %v38, 1
    %v40 = vadd.f32 %v38, %v39
    %v41 = vsel %vm33, %v29, 0.0
    %v42 = vrot.slane %v41, 4
    %v43 = vadd.f32 %v41, %v42
    %v44 = vrot.slane %v43, 2
    %v45 = vadd.f32 %v43, %v44
    %v46 = vrot.slane %v45, 1
    %v47 = vadd.f32 %v45, %v46
    %v48 = vsel %vm33, %v26, 0.0
    %v49 = vrot.slane %v48, 4
    %v50 = vadd.f32 %v48, %v49
    %v51 = vrot.slane %v50, 2
    %v52 = vadd.f32 %v50, %v51
    %v53 = vrot.slane %v52, 1
    %v54 = vadd.f32 %v52, %v53
    %v55 = vsel %vm33, %v30, 0.0
    %v56 = vrot.slane %v55, 4
    %v57 = vadd.f32 %v55, %v56
    %v58 = vrot.slane %v57, 2
    %v59 = vadd.f32 %v57, %v58
    %v60 = vrot.slane %v59, 1
    %v61 = vadd.f32 %v59, %v60
    %v62 = vmul.f32 %v40, 0.25
    %v63 = vmul.f32 %v47, 0.25
    %v64 = vmul.f32 %v54, 0.25
    %v65 = vmul.f32 %v61, 0.25
    %v66 = vadd.f32 %v62, 1e-08
    %v67 = vadd.f32 %v63, 1e-08
    %v68 = vadd.f32 %v64, 1e-08
    %v69 = vadd.f32 %v65, 1e-08
    %v70 = vrsqrt.pop %v66
    %v71 = vrsqrt.pop %v67
    %v72 = vrsqrt.pop %v68
    %v73 = vrsqrt.pop %v69
    %v78 = vcombine.low %v70, %v71
    %v79 = vcombine.low %v72, %v73
    %v82 = vmul.f32 %v23, %v78
    %v83 = vmul.f32 %v24, %v79
    %84 = vst [vmem:[#allocation5] sm:$0xff] %v82
    %85 = vst [vmem:[#allocation5 + $0x8] sm:$0xff] %v83
    // Predicated region
    $region10: #{tpu_custom_call.1} parent=1 // pred_check
      _
    $region11: #{tpu_custom_call.1} parent=1 // pred_check_branch
      %87 = sbr.rel (0) target = $region13
    $region12: #{tpu_custom_call.1} parent=1 // pred_region
      %s89 = ssub.s32 256, 256
      %90 = vsyncadd [#allocation4], %s89
      %s91 = sshll.u32 [#allocation5], 4
      %s92 = int_to_ptr.vmem [resolvable:$true] %s91
      %97 = dma.vmem_to_hbm [thread:$0]  %s92, 256, %s1, [#allocation4], 128, 128, 8
    $region13: #{tpu_custom_call.1} parent=1 // pred_fallthru
      _
    // Predicated region
    $region14: #{tpu_custom_call.1} parent=1 // pred_check
      _
    $region15: #{tpu_custom_call.1} parent=1 // pred_check_branch
      %99 = sbr.rel (0) target = $region17
    $region16: #{tpu_custom_call.1} parent=1 // pred_region
      %100 = dma.done [#allocation4], 256
    $region17: #{tpu_custom_call.1} parent=1 // pred_fallthru
      _
    %101 = vsyncpa [#allocation3], 1
    %102 = vsyncpa [#allocation4], 1

</llo_original>
